<compile_context>
chip_gen: v5e
topology: v5e:2x2
jax: 0.10.0
libtpu: 0.0.40
codegen_flags: <defaults>
</compile_context>

<pallas_src>
import jax
import jax.numpy as jnp
from jax.experimental import pallas as pl
from jax.experimental.pallas import tpu as pltpu


def _round_up(v, m):
    return ((v + m - 1) // m) * m


def _pick_batch_tile(N, nIn, expand_ratio, HW, HoWo, itemsize):
    """Choose how many batch elements (tn) each grid step processes.

    rows = tn * nIn is the MXU M dimension of the pooling matmul.  Targets:
      * rows <= 256 (one full MXU pass on v6e/v7x, two 128-row passes on v5e),
      * rows a multiple of the sublane tile (8 f32 / 16 bf16) so the folded-row
        BlockSpec satisfies the (8, 128) constraint,
      * double-buffered x/out tiles + single-buffered Pt within ~12 MiB,
      * bounded per-step store unroll (tn <= 32),
      * and, when the batch allows, >= 4 grid steps (DMA/compute overlap).
    """
    sub = max(8, 32 // max(1, itemsize))          # 8 (f32), 16 (bf16), 32 (int8)
    budget = 12 * 1024 * 1024
    pt_bytes = _round_up(HW, sub) * _round_up(HoWo, 128) * itemsize  # 1 buffer

    best = None
    for tn in range(1, N + 1):
        if N % tn:
            continue
        rows = tn * nIn
        ok_rows = (rows % sub == 0) or (rows == N * nIn)
        vmem = (2 * _round_up(rows, sub) * _round_up(HW, 128)            # x tile
                + 2 * tn * expand_ratio
                * _round_up(nIn, sub) * _round_up(HoWo, 128)             # out tile
                ) * itemsize + pt_bytes
        if ok_rows and rows <= 256 and tn <= 32 and vmem <= budget:
            best = tn
    if best is None:              # fallback: fold the whole batch in one step
        best = N

    if N // best < 4:             # prefer >= 4 grid steps if M fill stays >= 128
        smaller = [d for d in range(1, best)
                   if N % d == 0 and (d * nIn) % sub == 0
                   and d * nIn >= 128 and N // d >= 4]
        if smaller:
            best = max(smaller)
    return best


def make_downsample_b(nIn, nOut, stride, N, H, W, dtype):
    assert nOut % nIn == 0, "DownsampleB requires nOut to be a multiple of nIn"
    expand_ratio = nOut // nIn
    Ho, Wo = H // stride, W // stride
    HW, HoWo = H * W, Ho * Wo
    itemsize = jnp.dtype(dtype).itemsize

    tn = _pick_batch_tile(N, nIn, expand_ratio, HW, HoWo, itemsize)
    rows = tn * nIn
    grid = (N // tn,)

    # 0/1 pooling indicator P^T of shape (H*W, Ho*Wo): 1 where input pixel
    # (h, w) belongs to output pixel (h//stride, w//stride); trailing rows /
    # cols beyond Ho*stride / Wo*stride are masked (AvgPool2d floor
    # truncation).  The 1/stride**2 scale is applied in f32 inside the kernel.
    in_ho = jnp.arange(H)[:, None] // stride              # (H, 1)
    in_wo = jnp.arange(W)[None, :] // stride              # (1, W)
    valid = (in_ho < Ho) & (in_wo < Wo)                   # (H, W)
    out_flat = in_ho * Wo + in_wo                         # (H, W)
    pt = ((out_flat.reshape(HW, 1) == jnp.arange(HoWo)[None, :])
          & valid.reshape(HW, 1)).astype(dtype)           # (HW, HoWo), 0/1
    inv_area = 1.0 / float(stride * stride)

    def kernel(x_ref, pt_ref, o_ref):
        # x_ref : (tn*nIn, HW)   folded batch*channel rows (full MXU M fill)
        # pt_ref: (HW, HoWo)     0/1 pooling indicator (single-buffered)
        # o_ref : (tn, expand_ratio, nIn, HoWo)
        acc = jnp.dot(x_ref[...], pt_ref[...],
                      preferred_element_type=jnp.float32)
        pooled = (acc * inv_area).astype(o_ref.dtype)     # exact f32 scaling
        if expand_ratio > 1:
            # torch.cat([x] + [x.mul(0)] * (expand_ratio - 1), 1): the zero
            # channels are written straight from the kernel -- no wrapper
            # concatenate / extra HBM round trip for the pooled half.
            o_ref[:, 1:, :, :] = jnp.zeros(
                (tn, expand_ratio - 1, nIn, HoWo), o_ref.dtype)
        for j in range(tn):       # static unroll: batch element j of this tile
            o_ref[j, 0, :, :] = pooled[j * nIn:(j + 1) * nIn, :]

    flops = 2 * N * nIn * HW * HoWo
    bytes_accessed = (N * nIn * HW + HW * HoWo + N * nOut * HoWo) * itemsize

    pooled_call = pl.pallas_call(
        kernel,
        out_shape=jax.ShapeDtypeStruct((N, expand_ratio, nIn, HoWo), dtype),
        grid=grid,
        in_specs=[
            pl.BlockSpec((rows, HW), lambda b: (b, 0)),
            pl.BlockSpec((HW, HoWo), lambda b: (0, 0),
                         pipeline_mode=pl.Buffered(1)),
        ],
        out_specs=pl.BlockSpec((tn, expand_ratio, nIn, HoWo),
                               lambda b: (b, 0, 0, 0)),
        compiler_params=pltpu.CompilerParams(
            dimension_semantics=("parallel",)),
        cost_estimate=pl.CostEstimate(flops=flops, transcendentals=0,
                                      bytes_accessed=bytes_accessed),
    )

    def fwd(x):
        # Row-major reshapes on both ends are free; the kernel writes the
        # final (pooled + zero-expansion) layout directly.
        out = pooled_call(x.reshape(N * nIn, HW), pt)
        return out.reshape(N, nOut, Ho, Wo)

    return fwd


def _reference(x, stride, expand_ratio):
    N, C, H, W = x.shape
    Ho, Wo = H // stride, W // stride
    pooled = x[:, :, :Ho * stride, :Wo * stride].reshape(
        N, C, Ho, stride, Wo, stride).mean(axis=(3, 5))
    zeros = jnp.zeros((N, C * (expand_ratio - 1), Ho, Wo), x.dtype)
    return jnp.concatenate([pooled, zeros], axis=1)


if __name__ == "__main__":
    # DownsampleB(nIn=4, nOut=8, stride=2) on a (2, 4, 16, 16) input.
    N, nIn, H, W = 2, 4, 16, 16
    nOut, stride = 8, 2

    key = jax.random.PRNGKey(0)
    x = jax.random.normal(key, (N, nIn, H, W), dtype=jnp.float32)

    fwd = make_downsample_b(nIn, nOut, stride, N, H, W, x.dtype)
    out = jax.block_until_ready(fwd(x))

    ref = _reference(x, stride, nOut // nIn)
    assert out.shape == ref.shape, (out.shape, ref.shape)
    assert jnp.allclose(out, ref, atol=1e-5, rtol=1e-5), float(
        jnp.max(jnp.abs(out - ref)))
    print("KERNEL_OK")
</pallas_src>

<mosaic_0001>
module attributes {stable_mosaic.version = 11 : i64} {
  func.func @kernel(%arg0: i32, %arg1: memref<8x256xf32, #tpu.memory_space<vmem>>, %arg2: memref<256x64xf32, #tpu.memory_space<vmem>>, %arg3: memref<2x2x4x64xf32, #tpu.memory_space<vmem>>) attributes {dimension_semantics = [#tpu.dimension_semantics<parallel>], iteration_bounds = array<i64: 1>, scalar_prefetch = 0 : i64, scratch_operands = 0 : i64, tpu.core_type = #tpu.core_type<tc>, window_params = [{transform_indices = @transform_0, window_bounds = array<i64: 8, 256>}, {pipeline_mode = #tpu.pipeline_mode<synchronous>, transform_indices = @transform_1, window_bounds = array<i64: 256, 64>}, {transform_indices = @transform_2, window_bounds = array<i64: 2, 2, 4, 64>}]} {
    %c0 = arith.constant 0 : index
    %c0_0 = arith.constant 0 : index
    %0 = vector.load %arg1[%c0, %c0_0] : memref<8x256xf32, #tpu.memory_space<vmem>>, vector<8x256xf32>
    %c0_1 = arith.constant 0 : index
    %c0_2 = arith.constant 0 : index
    %1 = vector.load %arg2[%c0_1, %c0_2] : memref<256x64xf32, #tpu.memory_space<vmem>>, vector<256x64xf32>
    %cst = arith.constant dense<0.000000e+00> : vector<8x64xf32>
    %2 = tpu.matmul %0, %1, %cst {dimension_numbers = #tpu.dot_dimension_numbers<[1], [0], [0], [1], [0, 0, 1, 1], [], []>} : vector<8x256xf32>, vector<256x64xf32>, vector<8x64xf32> -> vector<8x64xf32>
    %cst_3 = arith.constant 2.500000e-01 : f32
    %3 = vector.broadcast %cst_3 : f32 to vector<8x64xf32>
    %4 = arith.mulf %2, %3 : vector<8x64xf32>
    %cst_4 = arith.constant 0.000000e+00 : f32
    %5 = vector.broadcast %cst_4 : f32 to vector<2x1x4x64xf32>
    %c0_5 = arith.constant 0 : index
    %c1 = arith.constant 1 : index
    %c0_6 = arith.constant 0 : index
    %c0_7 = arith.constant 0 : index
    %6 = vector.load %arg3[%c0_5, %c1, %c0_6, %c0_7] : memref<2x2x4x64xf32, #tpu.memory_space<vmem>>, vector<2x1x4x64xf32>
    tpu.vector_store %arg3[%c0_5, %c1, %c0_6, %c0_7], %5 {strides = array<i32>} : memref<2x2x4x64xf32, #tpu.memory_space<vmem>>, vector<2x1x4x64xf32>,
    %7 = vector.extract_strided_slice %4 {offsets = [0, 0], sizes = [4, 64], strides = [1, 1]} : vector<8x64xf32> to vector<4x64xf32>
    %c0_8 = arith.constant 0 : index
    %c0_9 = arith.constant 0 : index
    %c0_10 = arith.constant 0 : index
    %c0_11 = arith.constant 0 : index
    %8 = vector.load %arg3[%c0_8, %c0_9, %c0_10, %c0_11] : memref<2x2x4x64xf32, #tpu.memory_space<vmem>>, vector<1x1x4x64xf32>
    %9 = vector.shape_cast %8 : vector<1x1x4x64xf32> to vector<4x64xf32>
    %10 = vector.shape_cast %7 : vector<4x64xf32> to vector<1x1x4x64xf32>
    tpu.vector_store %arg3[%c0_8, %c0_9, %c0_10, %c0_11], %10 {strides = array<i32>} : memref<2x2x4x64xf32, #tpu.memory_space<vmem>>, vector<1x1x4x64xf32>,
    %11 = vector.extract_strided_slice %4 {offsets = [4, 0], sizes = [4, 64], strides = [1, 1]} : vector<8x64xf32> to vector<4x64xf32>
    %c1_12 = arith.constant 1 : index
    %c0_13 = arith.constant 0 : index
    %c0_14 = arith.constant 0 : index
    %c0_15 = arith.constant 0 : index
    %12 = vector.load %arg3[%c1_12, %c0_13, %c0_14, %c0_15] : memref<2x2x4x64xf32, #tpu.memory_space<vmem>>, vector<1x1x4x64xf32>
    %13 = vector.shape_cast %12 : vector<1x1x4x64xf32> to vector<4x64xf32>
    %14 = vector.shape_cast %11 : vector<4x64xf32> to vector<1x1x4x64xf32>
    tpu.vector_store %arg3[%c1_12, %c0_13, %c0_14, %c0_15], %14 {strides = array<i32>} : memref<2x2x4x64xf32, #tpu.memory_space<vmem>>, vector<1x1x4x64xf32>,
    return
  }
  func.func @transform_0(%arg0: i32) -> (i32, i32) {
    %c0_i32 = arith.constant 0 : i32
    %c0_i32_0 = arith.constant 0 : i32
    return %arg0, %c0_i32 : i32, i32
  }
  func.func @transform_1(%arg0: i32) -> (i32, i32) {
    %c0_i32 = arith.constant 0 : i32
    %c0_i32_0 = arith.constant 0 : i32
    %c0_i32_1 = arith.constant 0 : i32
    return %c0_i32, %c0_i32_0 : i32, i32
  }
  func.func @transform_2(%arg0: i32) -> (i32, i32, i32, i32) {
    %c0_i32 = arith.constant 0 : i32
    %c0_i32_0 = arith.constant 0 : i32
    %c0_i32_1 = arith.constant 0 : i32
    %c0_i32_2 = arith.constant 0 : i32
    return %arg0, %c0_i32, %c0_i32_0, %c0_i32_1 : i32, i32, i32, i32
  }
}

</mosaic_0001>

<llo_original>
// kernel: tpu_custom_call.1
$region0: #{tpu_custom_call.1}
  #allocation0 [shape = 'u32[]', space=smem, size = 0x4, offset = 0x4, fixed_abs, tag = 'smem constant byte address 0x4 - core index']
  #allocation1 [shape = 'u32[72,128]{1,0:T(1,128)}', space=vmem, size = 0x9000, scoped, tag = 'internal scratch']
  %s0 = inlined_call_operand.vmem [shape: f32[8,256], index: 0, kind: input, shape index: {}]
  %s1 = inlined_call_operand.vmem [shape: f32[256,64], index: 1, kind: input, shape index: {}]
  %s2 = inlined_call_operand.hbm [shape: f32[2,2,4,64], index: 2, kind: output, shape index: {}]
  %s3 = sld [smem:[#allocation0]]
  $region18: #{tpu_custom_call.1} parent=0
    _
  %s5 = ssub.s32 1, %s3
  %s6 = scalar_select 0, %s5, %s3
  $region1: #{tpu_custom_call.1} parent=0
    #allocation2 [shape = 'u8[8192]{0}', space=vmem, size = 0x2000, scoped, tag = 'output window, operand 0, single buffered']
    #allocation3 [shape = 's32[1]{0}', space=sflag, size = 0x4, scoped, tag = 'scoped memory for tpu_custom_call.1']
    %7 = vsyncpa [#allocation3], 0
    // Predicated region
    $region2: #{tpu_custom_call.1} parent=1 // pred_check
      _
    $region3: #{tpu_custom_call.1} parent=1 // pred_check_branch
      %9 = sbr.rel (0) target = $region5
    $region4: #{tpu_custom_call.1} parent=1 // pred_region
      _
    $region5: #{tpu_custom_call.1} parent=1 // pred_fallthru
      _
    // Predicated region
    $region6: #{tpu_custom_call.1} parent=1 // pred_check
      _
    $region7: #{tpu_custom_call.1} parent=1 // pred_check_branch
      %11 = sbr.rel (0) target = $region9
    $region8: #{tpu_custom_call.1} parent=1 // pred_region
      _
    $region9: #{tpu_custom_call.1} parent=1 // pred_fallthru
      _
    %v12 = vld [vmem:[%s0] sm:$0xff]
    %v13 = vld [vmem:[%s0 + $0x8] sm:$0xff]
    %v14 = vld [vmem:[%s1] sm:$0xff]
    %v15 = vld [vmem:[%s1 + $0x8] sm:$0xff]
    %v16 = vld [vmem:[%s1 + $0x10] sm:$0xff]
    %v17 = vld [vmem:[%s1 + $0x18] sm:$0xff]
    %v18 = vld [vmem:[%s1 + $0x20] sm:$0xff]
    %v19 = vld [vmem:[%s1 + $0x28] sm:$0xff]
    %v20 = vld [vmem:[%s1 + $0x30] sm:$0xff]
    %v21 = vld [vmem:[%s1 + $0x38] sm:$0xff]
    %v22 = vld [vmem:[%s1 + $0x40] sm:$0xff]
    %v23 = vld [vmem:[%s1 + $0x48] sm:$0xff]
    %v24 = vld [vmem:[%s1 + $0x50] sm:$0xff]
    %v25 = vld [vmem:[%s1 + $0x58] sm:$0xff]
    %v26 = vld [vmem:[%s1 + $0x60] sm:$0xff]
    %v27 = vld [vmem:[%s1 + $0x68] sm:$0xff]
    %v28 = vld [vmem:[%s1 + $0x70] sm:$0xff]
    %v29 = vld [vmem:[%s1 + $0x78] sm:$0xff]
    %v30 = vld [vmem:[%s1 + $0x80] sm:$0xff]
    %v31 = vld [vmem:[%s1 + $0x88] sm:$0xff]
    %v32 = vld [vmem:[%s1 + $0x90] sm:$0xff]
    %v33 = vld [vmem:[%s1 + $0x98] sm:$0xff]
    %v34 = vld [vmem:[%s1 + $0xa0] sm:$0xff]
    %v35 = vld [vmem:[%s1 + $0xa8] sm:$0xff]
    %v36 = vld [vmem:[%s1 + $0xb0] sm:$0xff]
    %v37 = vld [vmem:[%s1 + $0xb8] sm:$0xff]
    %v38 = vld [vmem:[%s1 + $0xc0] sm:$0xff]
    %v39 = vld [vmem:[%s1 + $0xc8] sm:$0xff]
    %v40 = vld [vmem:[%s1 + $0xd0] sm:$0xff]
    %v41 = vld [vmem:[%s1 + $0xd8] sm:$0xff]
    %v42 = vld [vmem:[%s1 + $0xe0] sm:$0xff]
    %v43 = vld [vmem:[%s1 + $0xe8] sm:$0xff]
    %v44 = vld [vmem:[%s1 + $0xf0] sm:$0xff]
    %v45 = vld [vmem:[%s1 + $0xf8] sm:$0xff]
    %46 = vmatpush.msra.mxu0 %v29
    %47 = vmatpush.msra.mxu0 %v28
    %48 = vmatpush.msra.mxu0 %v27
    %49 = vmatpush.msra.mxu0 %v26
    %50 = vmatpush.msra.mxu0 %v25
    %51 = vmatpush.msra.mxu0 %v24
    %52 = vmatpush.msra.mxu0 %v23
    %53 = vmatpush.msra.mxu0 %v22
    %54 = vmatpush.msra.mxu0 %v21
    %55 = vmatpush.msra.mxu0 %v20
    %56 = vmatpush.msra.mxu0 %v19
    %57 = vmatpush.msra.mxu0 %v18
    %58 = vmatpush.msra.mxu0 %v17
    %59 = vmatpush.msra.mxu0 %v16
    %60 = vmatpush.msra.mxu0 %v15
    %61 = vmatpush.msra.mxu0 %v14
    %62 = vmatmul.f32.gmra.mxu0 %v12
    %v63 = vpop.f32.mrf.mxu0
    %v64 = vadd.f32 0.0, %v63
    %65 = vdwg.mxu0
    %66 = vmatpush.msra.mxu0 %v45
    %67 = vmatpush.msra.mxu0 %v44
    %68 = vmatpush.msra.mxu0 %v43
    %69 = vmatpush.msra.mxu0 %v42
    %70 = vmatpush.msra.mxu0 %v41
    %71 = vmatpush.msra.mxu0 %v40
    %72 = vmatpush.msra.mxu0 %v39
    %73 = vmatpush.msra.mxu0 %v38
    %74 = vmatpush.msra.mxu0 %v37
    %75 = vmatpush.msra.mxu0 %v36
    %76 = vmatpush.msra.mxu0 %v35
    %77 = vmatpush.msra.mxu0 %v34
    %78 = vmatpush.msra.mxu0 %v33
    %79 = vmatpush.msra.mxu0 %v32
    %80 = vmatpush.msra.mxu0 %v31
    %81 = vmatpush.msra.mxu0 %v30
    %82 = vmatmul.f32.gmra.mxu0 %v13
    %v83 = vpop.f32.mrf.mxu0
    %v84 = vadd.f32 %v64, %v83
    %85 = vdwg.mxu0
    %v86 = vmul.f32 %v84, 0.25
    %s87 = scalar_lea.vmem [#allocation2], 4
    %vm88 = vcmask 519168
    %89 = vst.msk [vmem:[%s87] sm:$0xf] %vm88, 0.0
    %90 = vst.msk [vmem:[%s87 + $0x8] sm:$0xf] %vm88, 0.0
    %91 = vst.msk [vmem:[#allocation2] sm:$0xf] %vm88, %v86
    %s92 = scalar_lea.vmem [#allocation2], 8
    %vm93 = vcmask 523268
    %94 = vst.msk [vmem:[%s92 - $0x4] sm:$0xf0] %vm93, %v86
    // Predicated region
    $region10: #{tpu_custom_call.1} parent=1 // pred_check
      _
    $region11: #{tpu_custom_call.1} parent=1 // pred_check_branch
      %96 = sbr.rel (0) target = $region13
    $region12: #{tpu_custom_call.1} parent=1 // pred_region
      %98 = vsyncadd [#allocation3], 0
      %s99 = sshll.u32 [#allocation2], 4
      %s100 = int_to_ptr.vmem [resolvable:$true] %s99
      %s101 = sshll.u32 %s2, 4
      %s102 = int_to_ptr.hbm [resolvable:$true] %s101
      %107 = dma.vmem_to_hbm [thread:$0]  %s100, 256, %s102, [#allocation3], 64, 64, 4
    $region13: #{tpu_custom_call.1} parent=1 // pred_fallthru
      _
    // Predicated region
    $region14: #{tpu_custom_call.1} parent=1 // pred_check
      _
    $region15: #{tpu_custom_call.1} parent=1 // pred_check_branch
      %109 = sbr.rel (0) target = $region17
    $region16: #{tpu_custom_call.1} parent=1 // pred_region
      %111 = dma.done [#allocation3], 256
    $region17: #{tpu_custom_call.1} parent=1 // pred_fallthru
      _
    %112 = vsyncpa [#allocation3], 1

</llo_original>
